<compile_context>
chip_gen: v5e
topology: v5e:2x2
jax: 0.10.0
libtpu: 0.0.40
codegen_flags: <defaults>
</compile_context>

<pallas_src>
import functools

import jax
import jax.numpy as jnp
import numpy as np
from jax.experimental import pallas as pl
from jax.experimental.pallas import tpu as pltpu


def _sigmoid_bin_fwd_kernel(pred_ref, out_ref, *, bin_values, reg_scale,
                            step, vmin, vmax, use_fw_regression):
    # pred_ref: (length, 8, TL); channel k is a dense (8, TL) sublane/lane slab.
    # Running argmax over bin channels, unrolled (pure VPU compare/select).
    # Strict '>' keeps the FIRST max index on ties, matching torch.max/argmax.
    best_val = pred_ref[1].astype(jnp.float32)                 # (8, TL)
    best_bias = jnp.full_like(best_val, bin_values[0])         # (8, TL)
    for k in range(1, len(bin_values)):
        v = pred_ref[k + 1].astype(jnp.float32)                # dense (8, TL)
        take = v > best_val
        best_bias = jnp.where(take, bin_values[k], best_bias)
        best_val = jnp.maximum(best_val, v)

    if use_fw_regression:
        reg = pred_ref[0].astype(jnp.float32)
        result = (reg * reg_scale - reg_scale * 0.5) * step + best_bias
    else:
        result = best_bias

    out_ref[...] = jnp.clip(result, vmin, vmax)                # full (8, TL) vst


def _sigmoid_bin_pallas(pred3, *, bin_values, reg_scale, step, vmin, vmax,
                        use_fw_regression, tile_l):
    """pred3: (length, 8, n8) array (any float dtype). Returns (8, n8) f32."""
    length, _, n8 = pred3.shape

    # Keep >= 2 grid steps so v7x can shard the parallel axis across both TCs;
    # otherwise make tiles as big as requested (VMEM is a non-issue here).
    tile_cap = pl.cdiv(pl.cdiv(n8, 2), 128) * 128
    tile_eff = max(128, min(int(tile_l), tile_cap))
    num_tiles = pl.cdiv(n8, tile_eff)                 # last block may be partial

    kernel = functools.partial(
        _sigmoid_bin_fwd_kernel,
        bin_values=tuple(bin_values), reg_scale=float(reg_scale),
        step=float(step), vmin=float(vmin), vmax=float(vmax),
        use_fw_regression=bool(use_fw_regression))

    return pl.pallas_call(
        kernel,
        out_shape=jax.ShapeDtypeStruct((8, n8), jnp.float32),
        grid_spec=pltpu.PrefetchScalarGridSpec(
            num_scalar_prefetch=0,
            grid=(num_tiles,),
            in_specs=[
                pl.BlockSpec((length, 8, tile_eff), lambda i: (0, 0, i)),
            ],
            out_specs=pl.BlockSpec((8, tile_eff), lambda i: (0, i)),
        ),
        compiler_params=pltpu.CompilerParams(
            dimension_semantics=("parallel",)),
    )(pred3)


class SigmoidBinJAX:
    """Mirror of the PyTorch SigmoidBin module (forward pass only)."""

    def __init__(self, bin_count=10, min=0.0, max=1.0, reg_scale=2.0,
                 use_fw_regression=True, tile_l=2048, min_pallas_rows=8192):
        self.bin_count = bin_count
        self.length = bin_count + 1
        self.min = float(min)
        self.max = float(max)
        self.scale = float(max - min)
        self.reg_scale = float(reg_scale)
        self.step = self.scale / bin_count
        self.use_fw_regression = use_fw_regression
        self.tile_l = int(tile_l)
        self.min_pallas_rows = int(min_pallas_rows)
        # bins buffer == torch.range(start, end + 1e-4, step): bin centers.
        start = self.min + self.scale / 2.0 / bin_count
        self.bin_values = tuple(float(start + self.step * k)
                                for k in range(bin_count))
        self.bins = jnp.asarray(self.bin_values, dtype=jnp.float32)
        self._forward = jax.jit(self._forward_impl)
        # TODO(synk): training_loss (BCEWithLogitsLoss / MSELoss) is not part
        # of the forward pass and is not implemented here.

    def _forward_impl(self, pred):
        assert pred.shape[-1] == self.length, (pred.shape[-1], self.length)
        lead = pred.shape[:-1]
        n = int(np.prod(lead)) if lead else 1
        pred2d = pred.reshape(n, self.length)

        if n < self.min_pallas_rows:
            # Small problems: relayout + launch overhead would dominate; a
            # fused XLA expression (no transpose, no pad, no grid) is faster.
            p = pred2d.astype(jnp.float32)
            pred_reg = (p[:, 0] * self.reg_scale
                        - self.reg_scale / 2.0) * self.step
            bin_idx = jnp.argmax(p[:, 1:1 + self.bin_count], axis=-1)
            bias = self.bins[bin_idx]
            result = pred_reg + bias if self.use_fw_regression else bias
            return jnp.clip(result, self.min, self.max).reshape(lead)

        # Relayout to channel-major sublane-dense (length, 8, n8). Input dtype
        # is preserved (bf16 passthrough halves DMA bytes; kernel upcasts).
        # The <=7-row pad + transpose + reshape fuse into one copy under jit.
        pad8 = (-n) % 8
        if pad8:
            pred2d = jnp.pad(pred2d, ((0, pad8), (0, 0)))
        n_pad8 = n + pad8
        n8 = n_pad8 // 8
        pred3 = pred2d.T.reshape(self.length, 8, n8)

        out = _sigmoid_bin_pallas(
            pred3,
            bin_values=self.bin_values, reg_scale=self.reg_scale,
            step=self.step, vmin=self.min, vmax=self.max,
            use_fw_regression=self.use_fw_regression, tile_l=self.tile_l)

        # Invert the (8, n8) split and drop pad rows.
        return out.reshape(n_pad8)[:n].reshape(lead)

    def __call__(self, pred):
        return self._forward(pred)


def _reference_forward(pred, bins, *, bin_count, reg_scale, step, vmin, vmax):
    pred_reg = (pred[..., 0] * reg_scale - reg_scale / 2.0) * step
    bin_idx = jnp.argmax(pred[..., 1:1 + bin_count], axis=-1)
    return jnp.clip(pred_reg + bins[bin_idx], vmin, vmax)


if __name__ == "__main__":
    key = jax.random.PRNGKey(0)
    mod = SigmoidBinJAX(bin_count=10, min=0.0, max=1.0, reg_scale=2.0)
    k1, k2, k3 = jax.random.split(key, 3)

    def check(pred):
        out = jax.block_until_ready(mod(pred))
        ref = _reference_forward(
            pred, mod.bins, bin_count=mod.bin_count, reg_scale=mod.reg_scale,
            step=mod.step, vmin=mod.min, vmax=mod.max)
        np.testing.assert_allclose(np.asarray(out), np.asarray(ref),
                                   rtol=1e-6, atol=1e-6)

    # YOLO-like head: batch=2, anchors=3, 64x64 grid, 11 channels
    # -> 24576 rows: takes the Pallas path with >= 2 grid steps.
    check(jax.random.normal(k1, (2, 3, 64, 64, mod.length), dtype=jnp.float32))

    # Ragged row count (3*7*19*23 = 9177 rows): exercises the 8-row pad and
    # the Pallas partial last lane block.
    check(jax.random.normal(k2, (3, 7, 19, 23, mod.length), dtype=jnp.float32))

    # Small problem (400 rows): fused-XLA fallback path, no kernel launch.
    check(jax.random.normal(k3, (4, 100, mod.length), dtype=jnp.float32))

    print("KERNEL_OK")
</pallas_src>

<mosaic_0001>
module attributes {stable_mosaic.version = 11 : i64} {
  func.func @_sigmoid_bin_fwd_kernel(%arg0: i32, %arg1: memref<11x8x1536xf32, #tpu.memory_space<vmem>>, %arg2: memref<8x1536xf32, #tpu.memory_space<vmem>>) attributes {dimension_semantics = [#tpu.dimension_semantics<parallel>], iteration_bounds = array<i64: 2>, scalar_prefetch = 0 : i64, scratch_operands = 0 : i64, tpu.core_type = #tpu.core_type<tc>, window_params = [{transform_indices = @transform_0, window_bounds = array<i64: 11, 8, 1536>}, {transform_indices = @transform_1, window_bounds = array<i64: 8, 1536>}]} {
    %c1 = arith.constant 1 : index
    %c0 = arith.constant 0 : index
    %c0_0 = arith.constant 0 : index
    %0 = vector.load %arg1[%c1, %c0, %c0_0] : memref<11x8x1536xf32, #tpu.memory_space<vmem>>, vector<1x8x1536xf32>
    %1 = vector.shape_cast %0 : vector<1x8x1536xf32> to vector<8x1536xf32>
    %cst = arith.constant 5.000000e-02 : f32
    %2 = vector.broadcast %cst : f32 to vector<8x1536xf32>
    %c2 = arith.constant 2 : index
    %c0_1 = arith.constant 0 : index
    %c0_2 = arith.constant 0 : index
    %3 = vector.load %arg1[%c2, %c0_1, %c0_2] : memref<11x8x1536xf32, #tpu.memory_space<vmem>>, vector<1x8x1536xf32>
    %4 = vector.shape_cast %3 : vector<1x8x1536xf32> to vector<8x1536xf32>
    %5 = arith.cmpf ogt, %4, %1 : vector<8x1536xf32>
    %cst_3 = arith.constant 1.500000e-01 : f32
    %6 = vector.broadcast %cst_3 : f32 to vector<8x1536xf32>
    %7 = arith.select %5, %6, %2 : vector<8x1536xi1>, vector<8x1536xf32>
    %8 = arith.maximumf %1, %4 : vector<8x1536xf32>
    %c3 = arith.constant 3 : index
    %c0_4 = arith.constant 0 : index
    %c0_5 = arith.constant 0 : index
    %9 = vector.load %arg1[%c3, %c0_4, %c0_5] : memref<11x8x1536xf32, #tpu.memory_space<vmem>>, vector<1x8x1536xf32>
    %10 = vector.shape_cast %9 : vector<1x8x1536xf32> to vector<8x1536xf32>
    %11 = arith.cmpf ogt, %10, %8 : vector<8x1536xf32>
    %cst_6 = arith.constant 2.500000e-01 : f32
    %12 = vector.broadcast %cst_6 : f32 to vector<8x1536xf32>
    %13 = arith.select %11, %12, %7 : vector<8x1536xi1>, vector<8x1536xf32>
    %14 = arith.maximumf %8, %10 : vector<8x1536xf32>
    %c4 = arith.constant 4 : index
    %c0_7 = arith.constant 0 : index
    %c0_8 = arith.constant 0 : index
    %15 = vector.load %arg1[%c4, %c0_7, %c0_8] : memref<11x8x1536xf32, #tpu.memory_space<vmem>>, vector<1x8x1536xf32>
    %16 = vector.shape_cast %15 : vector<1x8x1536xf32> to vector<8x1536xf32>
    %17 = arith.cmpf ogt, %16, %14 : vector<8x1536xf32>
    %cst_9 = arith.constant 3.500000e-01 : f32
    %18 = vector.broadcast %cst_9 : f32 to vector<8x1536xf32>
    %19 = arith.select %17, %18, %13 : vector<8x1536xi1>, vector<8x1536xf32>
    %20 = arith.maximumf %14, %16 : vector<8x1536xf32>
    %c5 = arith.constant 5 : index
    %c0_10 = arith.constant 0 : index
    %c0_11 = arith.constant 0 : index
    %21 = vector.load %arg1[%c5, %c0_10, %c0_11] : memref<11x8x1536xf32, #tpu.memory_space<vmem>>, vector<1x8x1536xf32>
    %22 = vector.shape_cast %21 : vector<1x8x1536xf32> to vector<8x1536xf32>
    %23 = arith.cmpf ogt, %22, %20 : vector<8x1536xf32>
    %cst_12 = arith.constant 4.500000e-01 : f32
    %24 = vector.broadcast %cst_12 : f32 to vector<8x1536xf32>
    %25 = arith.select %23, %24, %19 : vector<8x1536xi1>, vector<8x1536xf32>
    %26 = arith.maximumf %20, %22 : vector<8x1536xf32>
    %c6 = arith.constant 6 : index
    %c0_13 = arith.constant 0 : index
    %c0_14 = arith.constant 0 : index
    %27 = vector.load %arg1[%c6, %c0_13, %c0_14] : memref<11x8x1536xf32, #tpu.memory_space<vmem>>, vector<1x8x1536xf32>
    %28 = vector.shape_cast %27 : vector<1x8x1536xf32> to vector<8x1536xf32>
    %29 = arith.cmpf ogt, %28, %26 : vector<8x1536xf32>
    %cst_15 = arith.constant 5.500000e-01 : f32
    %30 = vector.broadcast %cst_15 : f32 to vector<8x1536xf32>
    %31 = arith.select %29, %30, %25 : vector<8x1536xi1>, vector<8x1536xf32>
    %32 = arith.maximumf %26, %28 : vector<8x1536xf32>
    %c7 = arith.constant 7 : index
    %c0_16 = arith.constant 0 : index
    %c0_17 = arith.constant 0 : index
    %33 = vector.load %arg1[%c7, %c0_16, %c0_17] : memref<11x8x1536xf32, #tpu.memory_space<vmem>>, vector<1x8x1536xf32>
    %34 = vector.shape_cast %33 : vector<1x8x1536xf32> to vector<8x1536xf32>
    %35 = arith.cmpf ogt, %34, %32 : vector<8x1536xf32>
    %cst_18 = arith.constant 6.500000e-01 : f32
    %36 = vector.broadcast %cst_18 : f32 to vector<8x1536xf32>
    %37 = arith.select %35, %36, %31 : vector<8x1536xi1>, vector<8x1536xf32>
    %38 = arith.maximumf %32, %34 : vector<8x1536xf32>
    %c8 = arith.constant 8 : index
    %c0_19 = arith.constant 0 : index
    %c0_20 = arith.constant 0 : index
    %39 = vector.load %arg1[%c8, %c0_19, %c0_20] : memref<11x8x1536xf32, #tpu.memory_space<vmem>>, vector<1x8x1536xf32>
    %40 = vector.shape_cast %39 : vector<1x8x1536xf32> to vector<8x1536xf32>
    %41 = arith.cmpf ogt, %40, %38 : vector<8x1536xf32>
    %cst_21 = arith.constant 7.500000e-01 : f32
    %42 = vector.broadcast %cst_21 : f32 to vector<8x1536xf32>
    %43 = arith.select %41, %42, %37 : vector<8x1536xi1>, vector<8x1536xf32>
    %44 = arith.maximumf %38, %40 : vector<8x1536xf32>
    %c9 = arith.constant 9 : index
    %c0_22 = arith.constant 0 : index
    %c0_23 = arith.constant 0 : index
    %45 = vector.load %arg1[%c9, %c0_22, %c0_23] : memref<11x8x1536xf32, #tpu.memory_space<vmem>>, vector<1x8x1536xf32>
    %46 = vector.shape_cast %45 : vector<1x8x1536xf32> to vector<8x1536xf32>
    %47 = arith.cmpf ogt, %46, %44 : vector<8x1536xf32>
    %cst_24 = arith.constant 8.500000e-01 : f32
    %48 = vector.broadcast %cst_24 : f32 to vector<8x1536xf32>
    %49 = arith.select %47, %48, %43 : vector<8x1536xi1>, vector<8x1536xf32>
    %50 = arith.maximumf %44, %46 : vector<8x1536xf32>
    %c10 = arith.constant 10 : index
    %c0_25 = arith.constant 0 : index
    %c0_26 = arith.constant 0 : index
    %51 = vector.load %arg1[%c10, %c0_25, %c0_26] : memref<11x8x1536xf32, #tpu.memory_space<vmem>>, vector<1x8x1536xf32>
    %52 = vector.shape_cast %51 : vector<1x8x1536xf32> to vector<8x1536xf32>
    %53 = arith.cmpf ogt, %52, %50 : vector<8x1536xf32>
    %cst_27 = arith.constant 0.949999988 : f32
    %54 = vector.broadcast %cst_27 : f32 to vector<8x1536xf32>
    %55 = arith.select %53, %54, %49 : vector<8x1536xi1>, vector<8x1536xf32>
    %c0_28 = arith.constant 0 : index
    %c0_29 = arith.constant 0 : index
    %c0_30 = arith.constant 0 : index
    %56 = vector.load %arg1[%c0_28, %c0_29, %c0_30] : memref<11x8x1536xf32, #tpu.memory_space<vmem>>, vector<1x8x1536xf32>
    %57 = vector.shape_cast %56 : vector<1x8x1536xf32> to vector<8x1536xf32>
    %cst_31 = arith.constant 2.000000e+00 : f32
    %58 = vector.broadcast %cst_31 : f32 to vector<8x1536xf32>
    %59 = arith.mulf %57, %58 : vector<8x1536xf32>
    %cst_32 = arith.constant 1.000000e+00 : f32
    %60 = vector.broadcast %cst_32 : f32 to vector<8x1536xf32>
    %61 = arith.subf %59, %60 : vector<8x1536xf32>
    %cst_33 = arith.constant 1.000000e-01 : f32
    %62 = vector.broadcast %cst_33 : f32 to vector<8x1536xf32>
    %63 = arith.mulf %61, %62 : vector<8x1536xf32>
    %64 = arith.addf %63, %55 : vector<8x1536xf32>
    %cst_34 = arith.constant 0.000000e+00 : f32
    %cst_35 = arith.constant 1.000000e+00 : f32
    %65 = vector.broadcast %cst_34 : f32 to vector<8x1536xf32>
    %66 = arith.maximumf %65, %64 : vector<8x1536xf32>
    %67 = vector.broadcast %cst_35 : f32 to vector<8x1536xf32>
    %68 = arith.minimumf %67, %66 : vector<8x1536xf32>
    %c0_36 = arith.constant 0 : index
    %c0_37 = arith.constant 0 : index
    %69 = vector.load %arg2[%c0_36, %c0_37] : memref<8x1536xf32, #tpu.memory_space<vmem>>, vector<8x1536xf32>
    tpu.vector_store %arg2[%c0_36, %c0_37], %68 {strides = array<i32>} : memref<8x1536xf32, #tpu.memory_space<vmem>>, vector<8x1536xf32>,
    return
  }
  func.func @transform_0(%arg0: i32) -> (i32, i32, i32) {
    %c0_i32 = arith.constant 0 : i32
    %c0_i32_0 = arith.constant 0 : i32
    %c0_i32_1 = arith.constant 0 : i32
    return %c0_i32, %c0_i32_0, %arg0 : i32, i32, i32
  }
  func.func @transform_1(%arg0: i32) -> (i32, i32) {
    %c0_i32 = arith.constant 0 : i32
    %c0_i32_0 = arith.constant 0 : i32
    return %c0_i32, %arg0 : i32, i32
  }
}

</mosaic_0001>

<llo_original>
// kernel: _forward_impl.1
$region0: #{_forward_impl.1}
  #allocation0 [shape = 'u32[]', space=smem, size = 0x4, offset = 0x4, fixed_abs, tag = 'smem constant byte address 0x4 - core index']
  #allocation1 [shape = 'u32[72,128]{1,0:T(1,128)}', space=vmem, size = 0x9000, scoped, tag = 'internal scratch']
  %s0 = inlined_call_operand.vmem [shape: f32[11,8,3072], index: 0, kind: input, shape index: {}]
  %s1 = inlined_call_operand.vmem [shape: f32[8,3072], index: 1, kind: output, shape index: {}]
  %s2 = sld [smem:[#allocation0]]
  $region60: #{_forward_impl.1} parent=0
    _
  %s4 = ssub.s32 1, %s2
  %s5 = scalar_select 0, %s4, %s2
  $region1: #{_forward_impl.1} parent=0
    #allocation2 [shape = 'u8[1081344]{0}', space=vmem, size = 0x108000, scoped, tag = 'input window, operand 0']
    loop: start=0, step=1, limit=4
    $region2: #{_forward_impl.1} parent=1 // loop_pre_header
      _
    $region3: #{_forward_impl.1} parent=1 // loop_header
      %s7 = sphi 0, %s11
      %p8 = scmp.ge.s32.totalorder %s7, 4
      %s17 = sphi 0, %s19
      %s20 = sphi 0, %s17
      %s21 = sphi 0, %s20
      %s37 = sphi 0, %s21
      %s43 = sphi 0, %s45
      %s46 = sphi 0, %s43
      %s47 = sphi 0, %s46
      %s63 = sphi 0, %s47
    $region4: #{_forward_impl.1} parent=1 // loop_header_branch
      %10 = sbr.rel (%p8) target = $region8
    $region5: #{_forward_impl.1} parent=1 // loop_body
      %s12 = ssub.s32 %s7, 1
      %s13 = ssub.s32 %s7, 2
      %s14 = sadd.s32 %s7, 1
      %s15 = ssub.s32 %s7, %s14
      %p16 = scmp.eq.s32.totalorder %s15, 0
      %s18 = sadd.s32 %s17, 1
      %s19 = scalar_select %p16, %s17, %s18
      %p22 = pneg %p16
      %p23 = scmp.eq.s32.totalorder %s7, 1
      %p24 = por %p22, %p23
      %p25 = scmp.ne.s32.totalorder %s17, %s20
      %p26 = scmp.eq.s32.totalorder %s7, 0
      %p27 = por %p25, %p26
      %p28 = scmp.ne.s32.totalorder %s17, %s20
      %p29 = scmp.eq.s32.totalorder %s12, 1
      %p30 = por %p28, %p29
      %p31 = scmp.ne.s32.totalorder %s20, %s21
      %p32 = scmp.eq.s32.totalorder %s12, 0
      %p33 = por %p31, %p32
      %p34 = scmp.ne.s32.totalorder %s20, %s21
      %p35 = scmp.eq.s32.totalorder %s13, 1
      %p36 = por %p34, %p35
      %p38 = scmp.ne.s32.totalorder %s21, %s37
      %p39 = scmp.eq.s32.totalorder %s13, 0
      %p40 = por %p38, %p39
      %s41 = ssub.s32 %s7, %s14
      %p42 = scmp.eq.s32.totalorder %s41, 0
      %s44 = sadd.s32 %s43, 1
      %s45 = scalar_select %p42, %s43, %s44
      %p48 = pneg %p42
      %p49 = scmp.eq.s32.totalorder %s7, 1
      %p50 = por %p48, %p49
      %p51 = scmp.ne.s32.totalorder %s43, %s46
      %p52 = scmp.eq.s32.totalorder %s7, 0
      %p53 = por %p51, %p52
      %p54 = scmp.ne.s32.totalorder %s43, %s46
      %p55 = scmp.eq.s32.totalorder %s12, 1
      %p56 = por %p54, %p55
      %p57 = scmp.ne.s32.totalorder %s46, %s47
      %p58 = scmp.eq.s32.totalorder %s12, 0
      %p59 = por %p57, %p58
      %p60 = scmp.ne.s32.totalorder %s46, %s47
      %p61 = scmp.eq.s32.totalorder %s13, 1
      %p62 = por %p60, %p61
      %p64 = scmp.ne.s32.totalorder %s47, %s63
      %p65 = scmp.eq.s32.totalorder %s13, 0
      %p66 = por %p64, %p65
      %p67 = scmp.le.s32.totalorder 1, %s7
      %p68 = scmp.lt.s32.totalorder %s7, 3
      %p69 = pnand %p67, %p68
      %p70 = pneg %p69
      // Predicated region
      $region9: #{_forward_impl.1} parent=5 // pred_check
        _
      $region10: #{_forward_impl.1} parent=5 // pred_check_branch
        %72 = sbr.rel (%p69) target = $region12
      $region11: #{_forward_impl.1} parent=5 // pred_region
        %s73 = ssub.s32 %s7, 1
      $region12: #{_forward_impl.1} parent=5 // pred_fallthru
        _
      %p74 = scmp.lt.s32.totalorder %s7, 2
      // Predicated region
      $region13: #{_forward_impl.1} parent=5 // pred_check
        %p75 = pneg %p74
      $region14: #{_forward_impl.1} parent=5 // pred_check_branch
        %77 = sbr.rel (%p75) target = $region16
      $region15: #{_forward_impl.1} parent=5 // pred_region
        // Predicated region
        $region17: #{_forward_impl.1} parent=15 // pred_check
          %p78 = pneg %p27
        $region18: #{_forward_impl.1} parent=15 // pred_check_branch
          %80 = sbr.rel (%p78) target = $region20
        $region19: #{_forward_impl.1} parent=15 // pred_region
          %s81 = sand.u32 %s17, 1
          %s82 = sand.u32 %s17, 1
          %s83 = smul.addr %s82, 1056
          %s84 = scalar_lea.vmem [#allocation2], %s83
          %s85 = smul.u32 12, %s7
          %s86 = smul.addr %s85, 8
          %s87 = scalar_lea.vmem %s0, %s86
          // Predicated region
          $region21: #{_forward_impl.1} parent=19 // pred_check
            _
          $region22: #{_forward_impl.1} parent=19 // pred_check_branch
            %89 = sbr.rel (0) target = $region24
          $region23: #{_forward_impl.1} parent=19 // pred_region
            // Predicated region
            $region25: #{_forward_impl.1} parent=23 // pred_check
              _
            $region26: #{_forward_impl.1} parent=23 // pred_check_branch
              %91 = sbr.rel (0) target = $region28
            $region27: #{_forward_impl.1} parent=23 // pred_region
              loop: start=0, step=1, limit=1
              $region29: #{_forward_impl.1} parent=27 // loop_pre_header
                _
              $region30: #{_forward_impl.1} parent=27 // loop_header
                %s93 = sphi 0, %s97
                %p94 = scmp.ge.s32.totalorder %s93, 1
                %s98 = sphi %s87, %s87
                %s99 = sphi %s84, %s84
              $region31: #{_forward_impl.1} parent=27 // loop_header_branch
                %96 = sbr.rel (%p94) target = $region35
              $region32: #{_forward_impl.1} parent=27 // loop_body
                %v100 = vld [vmem:[%s98] sm:$0xff]
                %101 = vst [vmem:[%s99] sm:$0xff] %v100
                %v102 = vld [vmem:[%s98 + $0x8] sm:$0xff]
                %103 = vst [vmem:[%s99 + $0x8] sm:$0xff] %v102
                %v104 = vld [vmem:[%s98 + $0x10] sm:$0xff]
                %105 = vst [vmem:[%s99 + $0x10] sm:$0xff] %v104
                %v106 = vld [vmem:[%s98 + $0x18] sm:$0xff]
                %107 = vst [vmem:[%s99 + $0x18] sm:$0xff] %v106
                %v108 = vld [vmem:[%s98 + $0x20] sm:$0xff]
                %109 = vst [vmem:[%s99 + $0x20] sm:$0xff] %v108
                %v110 = vld [vmem:[%s98 + $0x28] sm:$0xff]
                %111 = vst [vmem:[%s99 + $0x28] sm:$0xff] %v110
                %v112 = vld [vmem:[%s98 + $0x30] sm:$0xff]
                %113 = vst [vmem:[%s99 + $0x30] sm:$0xff] %v112
                %v114 = vld [vmem:[%s98 + $0x38] sm:$0xff]
                %115 = vst [vmem:[%s99 + $0x38] sm:$0xff] %v114
                %v116 = vld [vmem:[%s98 + $0x40] sm:$0xff]
                %117 = vst [vmem:[%s99 + $0x40] sm:$0xff] %v116
                %v118 = vld [vmem:[%s98 + $0x48] sm:$0xff]
                %119 = vst [vmem:[%s99 + $0x48] sm:$0xff] %v118
                %v120 = vld [vmem:[%s98 + $0x50] sm:$0xff]
                %121 = vst [vmem:[%s99 + $0x50] sm:$0xff] %v120
                %v122 = vld [vmem:[%s98 + $0x58] sm:$0xff]
                %123 = vst [vmem:[%s99 + $0x58] sm:$0xff] %v122
                %v124 = vld [vmem:[%s98 + $0xc0] sm:$0xff]
                %125 = vst [vmem:[%s99 + $0x60] sm:$0xff] %v124
                %v126 = vld [vmem:[%s98 + $0xc8] sm:$0xff]
                %127 = vst [vmem:[%s99 + $0x68] sm:$0xff] %v126
                %v128 = vld [vmem:[%s98 + $0xd0] sm:$0xff]
                %129 = vst [vmem:[%s99 + $0x70] sm:$0xff] %v128
                %v130 = vld [vmem:[%s98 + $0xd8] sm:$0xff]
                %131 = vst [vmem:[%s99 + $0x78] sm:$0xff] %v130
                %v132 = vld [vmem:[%s98 + $0xe0] sm:$0xff]
                %133 = vst [vmem:[%s99 + $0x80] sm:$0xff] %v132
                %v134 = vld [vmem:[%s98 + $0xe8] sm:$0xff]
                %135 = vst [vmem:[%s99 + $0x88] sm:$0xff] %v134
                %v136 = vld [vmem:[%s98 + $0xf0] sm:$0xff]
                %137 = vst [vmem:[%s99 + $0x90] sm:$0xff] %v136
                %v138 = vld [vmem:[%s98 + $0xf8] sm:$0xff]
                %139 = vst [vmem:[%s99 + $0x98] sm:$0xff] %v138
                %v140 = vld [vmem:[%s98 + $0x100] sm:$0xff]
                %141 = vst [vmem:[%s99 + $0xa0] sm:$0xff] %v140
                %v142 = vld [vmem:[%s98 + $0x108] sm:$0xff]
                %143 = vst [vmem:[%s99 + $0xa8] sm:$0xff] %v142
                %v144 = vld [vmem:[%s98 + $0x110] sm:$0xff]
                %145 = vst [vmem:[%s99 + $0xb0] sm:$0xff] %v144
                %v146 = vld [vmem:[%s98 + $0x118] sm:$0xff]
                %147 = vst [vmem:[%s99 + $0xb8] sm:$0xff] %v146
                %v148 = vld [vmem:[%s98 + $0x180] sm:$0xff]
                %149 = vst [vmem:[%s99 + $0xc0] sm:$0xff] %v148
                %v150 = vld [vmem:[%s98 + $0x188] sm:$0xff]
                %151 = vst [vmem:[%s99 + $0xc8] sm:$0xff] %v150
                %v152 = vld [vmem:[%s98 + $0x190] sm:$0xff]
                %153 = vst [vmem:[%s99 + $0xd0] sm:$0xff] %v152
                %v154 = vld [vmem:[%s98 + $0x198] sm:$0xff]
                %155 = vst [vmem:[%s99 + $0xd8] sm:$0xff] %v154
                %v156 = vld [vmem:[%s98 + $0x1a0] sm:$0xff]
                %157 = vst [vmem:[%s99 + $0xe0] sm:$0xff] %v156
                %v158 = vld [vmem:[%s98 + $0x1a8] sm:$0xff]
                %159 = vst [vmem:[%s99 + $0xe8] sm:$0xff] %v158
                %v160 = vld [vmem:[%s98 + $0x1b0] sm:$0xff]
                %161 = vst [vmem:[%s99 + $0xf0] sm:$0xff] %v160
                %v162 = vld [vmem:[%s98 + $0x1b8] sm:$0xff]
                %163 = vst [vmem:[%s99 + $0xf8] sm:$0xff] %v162
                %v164 = vld [vmem:[%s98 + $0x1c0] sm:$0xff]
                %165 = vst [vmem:[%s99 + $0x100] sm:$0xff] %v164
                %v166 = vld [vmem:[%s98 + $0x1c8] sm:$0xff]
                %167 = vst [vmem:[%s99 + $0x108] sm:$0xff] %v166
                %v168 = vld [vmem:[%s98 + $0x1d0] sm:$0xff]
                %169 = vst [vmem:[%s99 + $0x110] sm:$0xff] %v168
                %v170 = vld [vmem:[%s98 + $0x1d8] sm:$0xff]
                %171 = vst [vmem:[%s99 + $0x118] sm:$0xff] %v170
                %v172 = vld [vmem:[%s98 + $0x240] sm:$0xff]
                %173 = vst [vmem:[%s99 + $0x120] sm:$0xff] %v172
                %v174 = vld [vmem:[%s98 + $0x248] sm:$0xff]
                %175 = vst [vmem:[%s99 + $0x128] sm:$0xff] %v174
                %v176 = vld [vmem:[%s98 + $0x250] sm:$0xff]
                %177 = vst [vmem:[%s99 + $0x130] sm:$0xff] %v176
                %v178 = vld [vmem:[%s98 + $0x258] sm:$0xff]
                %179 = vst [vmem:[%s99 + $0x138] sm:$0xff] %v178
                %v180 = vld [vmem:[%s98 + $0x260] sm:$0xff]
                %181 = vst [vmem:[%s99 + $0x140] sm:$0xff] %v180
                %v182 = vld [vmem:[%s98 + $0x268] sm:$0xff]
                %183 = vst [vmem:[%s99 + $0x148] sm:$0xff] %v182
                %v184 = vld [vmem:[%s98 + $0x270] sm:$0xff]
                %185 = vst [vmem:[%s99 + $0x150] sm:$0xff] %v184
                %v186 = vld [vmem:[%s98 + $0x278] sm:$0xff]
                %187 = vst [vmem:[%s99 + $0x158] sm:$0xff] %v186
                %v188 = vld [vmem:[%s98 + $0x280] sm:$0xff]
                %189 = vst [vmem:[%s99 + $0x160] sm:$0xff] %v188
                %v190 = vld [vmem:[%s98 + $0x288] sm:$0xff]
                %191 = vst [vmem:[%s99 + $0x168] sm:$0xff] %v190
                %v192 = vld [vmem:[%s98 + $0x290] sm:$0xff]
                %193 = vst [vmem:[%s99 + $0x170] sm:$0xff] %v192
                %v194 = vld [vmem:[%s98 + $0x298] sm:$0xff]
                %195 = vst [vmem:[%s99 + $0x178] sm:$0xff] %v194
                %v196 = vld [vmem:[%s98 + $0x300] sm:$0xff]
                %197 = vst [vmem:[%s99 + $0x180] sm:$0xff] %v196
                %v198 = vld [vmem:[%s98 + $0x308] sm:$0xff]
                %199 = vst [vmem:[%s99 + $0x188] sm:$0xff] %v198
                %v200 = vld [vmem:[%s98 + $0x310] sm:$0xff]
                %201 = vst [vmem:[%s99 + $0x190] sm:$0xff] %v200
                %v202 = vld [vmem:[%s98 + $0x318] sm:$0xff]
                %203 = vst [vmem:[%s99 + $0x198] sm:$0xff] %v202
                %v204 = vld [vmem:[%s98 + $0x320] sm:$0xff]
                %205 = vst [vmem:[%s99 + $0x1a0] sm:$0xff] %v204
                %v206 = vld [vmem:[%s98 + $0x328] sm:$0xff]
                %207 = vst [vmem:[%s99 + $0x1a8] sm:$0xff] %v206
                %v208 = vld [vmem:[%s98 + $0x330] sm:$0xff]
                %209 = vst [vmem:[%s99 + $0x1b0] sm:$0xff] %v208
                %v210 = vld [vmem:[%s98 + $0x338] sm:$0xff]
                %211 = vst [vmem:[%s99 + $0x1b8] sm:$0xff] %v210
                %v212 = vld [vmem:[%s98 + $0x340] sm:$0xff]
                %213 = vst [vmem:[%s99 + $0x1c0] sm:$0xff] %v212
                %v214 = vld [vmem:[%s98 + $0x348] sm:$0xff]
                %215 = vst [vmem:[%s99 + $0x1c8] sm:$0xff] %v214
                %v216 = vld [vmem:[%s98 + $0x350] sm:$0xff]
                %217 = vst [vmem:[%s99 + $0x1d0] sm:$0xff] %v216
                %v218 = vld [vmem:[%s98 + $0x358] sm:$0xff]
                %219 = vst [vmem:[%s99 + $0x1d8] sm:$0xff] %v218
                %v220 = vld [vmem:[%s98 + $0x3c0] sm:$0xff]
                %221 = vst [vmem:[%s99 + $0x1e0] sm:$0xff] %v220
                %v222 = vld [vmem:[%s98 + $0x3c8] sm:$0xff]
                %223 = vst [vmem:[%s99 + $0x1e8] sm:$0xff] %v222
                %v224 = vld [vmem:[%s98 + $0x3d0] sm:$0xff]
                %225 = vst [vmem:[%s99 + $0x1f0] sm:$0xff] %v224
                %v226 = vld [vmem:[%s98 + $0x3d8] sm:$0xff]
                %227 = vst [vmem:[%s99 + $0x1f8] sm:$0xff] %v226
                %v228 = vld [vmem:[%s98 + $0x3e0] sm:$0xff]
                %229 = vst [vmem:[%s99 + $0x200] sm:$0xff] %v228
                %v230 = vld [vmem:[%s98 + $0x3e8] sm:$0xff]
                %231 = vst [vmem:[%s99 + $0x208] sm:$0xff] %v230
                %v232 = vld [vmem:[%s98 + $0x3f0] sm:$0xff]
                %233 = vst [vmem:[%s99 + $0x210] sm:$0xff] %v232
                %v234 = vld [vmem:[%s98 + $0x3f8] sm:$0xff]
                %235 = vst [vmem:[%s99 + $0x218] sm:$0xff] %v234
                %v236 = vld [vmem:[%s98 + $0x400] sm:$0xff]
                %237 = vst [vmem:[%s99 + $0x220] sm:$0xff] %v236
                %v238 = vld [vmem:[%s98 + $0x408] sm:$0xff]
                %239 = vst [vmem:[%s99 + $0x228] sm:$0xff] %v238
                %v240 = vld [vmem:[%s98 + $0x410] sm:$0xff]
                %241 = vst [vmem:[%s99 + $0x230] sm:$0xff] %v240
                %v242 = vld [vmem:[%s98 + $0x418] sm:$0xff]
                %243 = vst [vmem:[%s99 + $0x238] sm:$0xff] %v242
                %v244 = vld [vmem:[%s98 + $0x480] sm:$0xff]
                %245 = vst [vmem:[%s99 + $0x240] sm:$0xff] %v244
                %v246 = vld [vmem:[%s98 + $0x488] sm:$0xff]
                %247 = vst [vmem:[%s99 + $0x248] sm:$0xff] %v246
                %v248 = vld [vmem:[%s98 + $0x490] sm:$0xff]
                %249 = vst [vmem:[%s99 + $0x250] sm:$0xff] %v248
                %v250 = vld [vmem:[%s98 + $0x498] sm:$0xff]
                %251 = vst [vmem:[%s99 + $0x258] sm:$0xff] %v250
                %v252 = vld [vmem:[%s98 + $0x4a0] sm:$0xff]
                %253 = vst [vmem:[%s99 + $0x260] sm:$0xff] %v252
                %v254 = vld [vmem:[%s98 + $0x4a8] sm:$0xff]
                %255 = vst [vmem:[%s99 + $0x268] sm:$0xff] %v254
                %v256 = vld [vmem:[%s98 + $0x4b0] sm:$0xff]
                %257 = vst [vmem:[%s99 + $0x270] sm:$0xff] %v256
                %v258 = vld [vmem:[%s98 + $0x4b8] sm:$0xff]
                %259 = vst [vmem:[%s99 + $0x278] sm:$0xff] %v258
                %v260 = vld [vmem:[%s98 + $0x4c0] sm:$0xff]
                %261 = vst [vmem:[%s99 + $0x280] sm:$0xff] %v260
                %v262 = vld [vmem:[%s98 + $0x4c8] sm:$0xff]
                %263 = vst [vmem:[%s99 + $0x288] sm:$0xff] %v262
                %v264 = vld [vmem:[%s98 + $0x4d0] sm:$0xff]
                %265 = vst [vmem:[%s99 + $0x290] sm:$0xff] %v264
                %v266 = vld [vmem:[%s98 + $0x4d8] sm:$0xff]
                %267 = vst [vmem:[%s99 + $0x298] sm:$0xff] %v266
                %v268 = vld [vmem:[%s98 + $0x540] sm:$0xff]
                %269 = vst [vmem:[%s99 + $0x2a0] sm:$0xff] %v268
                %v270 = vld [vmem:[%s98 + $0x548] sm:$0xff]
                %271 = vst [vmem:[%s99 + $0x2a8] sm:$0xff] %v270
                %v272 = vld [vmem:[%s98 + $0x550] sm:$0xff]
                %273 = vst [vmem:[%s99 + $0x2b0] sm:$0xff] %v272
                %v274 = vld [vmem:[%s98 + $0x558] sm:$0xff]
                %275 = vst [vmem:[%s99 + $0x2b8] sm:$0xff] %v274
                %v276 = vld [vmem:[%s98 + $0x560] sm:$0xff]
                %277 = vst [vmem:[%s99 + $0x2c0] sm:$0xff] %v276
                %v278 = vld [vmem:[%s98 + $0x568] sm:$0xff]
                %279 = vst [vmem:[%s99 + $0x2c8] sm:$0xff] %v278
                %v280 = vld [vmem:[%s98 + $0x570] sm:$0xff]
                %281 = vst [vmem:[%s99 + $0x2d0] sm:$0xff] %v280
                %v282 = vld [vmem:[%s98 + $0x578] sm:$0xff]
                %283 = vst [vmem:[%s99 + $0x2d8] sm:$0xff] %v282
                %v284 = vld [vmem:[%s98 + $0x580] sm:$0xff]
                %285 = vst [vmem:[%s99 + $0x2e0] sm:$0xff] %v284
                %v286 = vld [vmem:[%s98 + $0x588] sm:$0xff]
                %287 = vst [vmem:[%s99 + $0x2e8] sm:$0xff] %v286
                %v288 = vld [vmem:[%s98 + $0x590] sm:$0xff]
                %289 = vst [vmem:[%s99 + $0x2f0] sm:$0xff] %v288
                %v290 = vld [vmem:[%s98 + $0x598] sm:$0xff]
                %291 = vst [vmem:[%s99 + $0x2f8] sm:$0xff] %v290
                %v292 = vld [vmem:[%s98 + $0x600] sm:$0xff]
                %293 = vst [vmem:[%s99 + $0x300] sm:$0xff] %v292
                %v294 = vld [vmem:[%s98 + $0x608] sm:$0xff]
                %295 = vst [vmem:[%s99 + $0x308] sm:$0xff] %v294
                %v296 = vld [vmem:[%s98 + $0x610] sm:$0xff]
                %297 = vst [vmem:[%s99 + $0x310] sm:$0xff] %v296
                %v298 = vld [vmem:[%s98 + $0x618] sm:$0xff]
                %299 = vst [vmem:[%s99 + $0x318] sm:$0xff] %v298
                %v300 = vld [vmem:[%s98 + $0x620] sm:$0xff]
                %301 = vst [vmem:[%s99 + $0x320] sm:$0xff] %v300
                %v302 = vld [vmem:[%s98 + $0x628] sm:$0xff]
                %303 = vst [vmem:[%s99 + $0x328] sm:$0xff] %v302
                %v304 = vld [vmem:[%s98 + $0x630] sm:$0xff]
                %305 = vst [vmem:[%s99 + $0x330] sm:$0xff] %v304
                %v306 = vld [vmem:[%s98 + $0x638] sm:$0xff]
                %307 = vst [vmem:[%s99 + $0x338] sm:$0xff] %v306
                %v308 = vld [vmem:[%s98 + $0x640] sm:$0xff]
                %309 = vst [vmem:[%s99 + $0x340] sm:$0xff] %v308
                %v310 = vld [vmem:[%s98 + $0x648] sm:$0xff]
                %311 = vst [vmem:[%s99 + $0x348] sm:$0xff] %v310
                %v312 = vld [vmem:[%s98 + $0x650] sm:$0xff]
                %313 = vst [vmem:[%s99 + $0x350] sm:$0xff] %v312
                %v314 = vld [vmem:[%s98 + $0x658] sm:$0xff]
                %315 = vst [vmem:[%s99 + $0x358] sm:$0xff] %v314
                %v316 = vld [vmem:[%s98 + $0x6c0] sm:$0xff]
                %317 = vst [vmem:[%s99 + $0x360] sm:$0xff] %v316
                %v318 = vld [vmem:[%s98 + $0x6c8] sm:$0xff]
                %319 = vst [vmem:[%s99 + $0x368] sm:$0xff] %v318
                %v320 = vld [vmem:[%s98 + $0x6d0] sm:$0xff]
                %321 = vst [vmem:[%s99 + $0x370] sm:$0xff] %v320
                %v322 = vld [vmem:[%s98 + $0x6d8] sm:$0xff]
                %323 = vst [vmem:[%s99 + $0x378] sm:$0xff] %v322
                %v324 = vld [vmem:[%s98 + $0x6e0] sm:$0xff]
                %325 = vst [vmem:[%s99 + $0x380] sm:$0xff] %v324
                %v326 = vld [vmem:[%s98 + $0x6e8] sm:$0xff]
                %327 = vst [vmem:[%s99 + $0x388] sm:$0xff] %v326
                %v328 = vld [vmem:[%s98 + $0x6f0] sm:$0xff]
                %329 = vst [vmem:[%s99 + $0x390] sm:$0xff] %v328
                %v330 = vld [vmem:[%s98 + $0x6f8] sm:$0xff]
                %331 = vst [vmem:[%s99 + $0x398] sm:$0xff] %v330
                %v332 = vld [vmem:[%s98 + $0x700] sm:$0xff]
                %333 = vst [vmem:[%s99 + $0x3a0] sm:$0xff] %v332
                %v334 = vld [vmem:[%s98 + $0x708] sm:$0xff]
                %335 = vst [vmem:[%s99 + $0x3a8] sm:$0xff] %v334
                %v336 = vld [vmem:[%s98 + $0x710] sm:$0xff]
                %337 = vst [vmem:[%s99 + $0x3b0] sm:$0xff] %v336
                %v338 = vld [vmem:[%s98 + $0x718] sm:$0xff]
                %339 = vst [vmem:[%s99 + $0x3b8] sm:$0xff] %v338
                %v340 = vld [vmem:[%s98 + $0x780] sm:$0xff]
                %341 = vst [vmem:[%s99 + $0x3c0] sm:$0xff] %v340
                %v342 = vld [vmem:[%s98 + $0x788] sm:$0xff]
                %343 = vst [vmem:[%s99 + $0x3c8] sm:$0xff] %v342
                %v344 = vld [vmem:[%s98 + $0x790] sm:$0xff]
                %345 = vst [vmem:[%s99 + $0x3d0] sm:$0xff] %v344
                %v346 = vld [vmem:[%s98 + $0x798] sm:$0xff]
                %347 = vst [vmem:[%s99 + $0x3d8] sm:$0xff] %v346
                %v348 = vld [vmem:[%s98 + $0x7a0] sm:$0xff]
                %349 = vst [vmem:[%s99 + $0x3e0] sm:$0xff] %v348
                %v350 = vld [vmem:[%s98 + $0x7a8] sm:$0xff]
                %351 = vst [vmem:[%s99 + $0x3e8] sm:$0xff] %v350
                %v352 = vld [vmem:[%s98 + $0x7b0] sm:$0xff]
                %353 = vst [vmem:[%s99 + $0x3f0] sm:$0xff] %v352
                %v354 = vld [vmem:[%s98 + $0x7b8] sm:$0xff]
                %355 = vst [vmem:[%s99 + $0x3f8] sm:$0xff] %v354
                %v356 = vld [vmem:[%s98 + $0x7c0] sm:$0xff]
                %357 = vst [vmem:[%s99 + $0x400] sm:$0xff] %v356
                %v358 = vld [vmem:[%s98 + $0x7c8] sm:$0xff]
                %359 = vst [vmem:[%s99 + $0x408] sm:$0xff] %v358
                %v360 = vld [vmem:[%s98 + $0x7d0] sm:$0xff]
                %361 = vst [vmem:[%s99 + $0x410] sm:$0xff] %v360
                %v362 = vld [vmem:[%s98 + $0x7d8] sm:$0xff]
                %363 = vst [vmem:[%s99 + $0x418] sm:$0xff] %v362
              $region33: #{_forward_impl.1} parent=27 // loop_footer
                %s97 = sadd.s32 1, %s93
              $region34: #{_forward_impl.1} parent=27 // loop_footer_branch
                %92 = sbr.rel target = $region30
              $region35: #{_forward_impl.1} parent=27 // loop_exit
                _
            $region28: #{_forward_impl.1} parent=23 // pred_fallthru
              _
            // Predicated region
            $region36: #{_forward_impl.1} parent=23 // pred_check
              _
            $region37: #{_forward_impl.1} parent=23 // pred_check_branch
              %365 = sbr.rel target = $region39
            $region38: #{_forward_impl.1} parent=23 // pred_region
              _
            $region39: #{_forward_impl.1} parent=23 // pred_fallthru
              _
          $region24: #{_forward_impl.1} parent=19 // pred_fallthru
            _
          %366 = vnop
        $region20: #{_forward_impl.1} parent=15 // pred_fallthru
          _
      $region16: #{_forward_impl.1} parent=5 // pred_fallthru
        _
      %p367 = scmp.le.s32.totalorder 1, %s7
      %p368 = scmp.lt.s32.totalorder %s7, 3
      %p369 = pnand %p367, %p368
      %p370 = pneg %p369
      // Predicated region
      $region40: #{_forward_impl.1} parent=5 // pred_check
        _
      $region41: #{_forward_impl.1} parent=5 // pred_check_branch
        %372 = sbr.rel (%p369) target = $region43
      $region42: #{_forward_impl.1} parent=5 // pred_region
        %s373 = ssub.s32 %s7, 1
        %s374 = sand.u32 %s20, 1
        %s375 = sand.u32 %s20, 1
        %s376 = smul.addr %s375, 1056
        %s377 = scalar_lea.vmem [#allocation2], %s376
        // Predicated region
        $region44: #{_forward_impl.1} parent=42 // pred_check
          %p378 = pneg %p33
        $region45: #{_forward_impl.1} parent=42 // pred_check_branch
          %380 = sbr.rel (%p378) target = $region47
        $region46: #{_forward_impl.1} parent=42 // pred_region
          _
        $region47: #{_forward_impl.1} parent=42 // pred_fallthru
          _
        %s381 = sand.u32 %s20, 1
        %s382 = sand.u32 %s20, 1
        %s383 = smul.addr %s382, 1056
        %s384 = scalar_lea.vmem [#allocation2], %s383
        %p385 = pneg %p33
        %p386 = pneg %p30
        %p387 = pneg %p59
        %p388 = pneg %p56
        %s389 = smul.u32 12, %s12
        %p390 = scmp.lt.s32.totalorder %s389, 23
        %s391 = scalar_select %p390, %s389, 23
        %s392 = smul.addr %s391, 8
        %s393 = scalar_lea.vmem %s1, %s392
        %s394 = smul.u32 12, %s12
        %s395 = smul.u32 12, %s12
        %p396 = scmp.lt.s32.totalorder %s395, 23
        %s397 = scalar_select %p396, %s395, 23
        %s398 = smul.addr %s397, 8
        %s399 = scalar_lea.vmem %s1, %s398
        %s400 = smul.u32 12, %s12
        %s401 = scalar_lea.vmem %s377, 96 [#allocation2]
        %v402 = vld [vmem:[%s401] sm:$0xff]
        %v403 = vld [vmem:[%s401 + $0x8] sm:$0xff]
        %v404 = vld [vmem:[%s401 + $0x10] sm:$0xff]
        %v405 = vld [vmem:[%s401 + $0x18] sm:$0xff]
        %v406 = vld [vmem:[%s401 + $0x20] sm:$0xff]
        %v407 = vld [vmem:[%s401 + $0x28] sm:$0xff]
        %v408 = vld [vmem:[%s401 + $0x30] sm:$0xff]
        %v409 = vld [vmem:[%s401 + $0x38] sm:$0xff]
        %v410 = vld [vmem:[%s401 + $0x40] sm:$0xff]
        %v411 = vld [vmem:[%s401 + $0x48] sm:$0xff]
        %v412 = vld [vmem:[%s401 + $0x50] sm:$0xff]
        %v413 = vld [vmem:[%s401 + $0x58] sm:$0xff]
        %s414 = scalar_lea.vmem %s377, 192 [#allocation2]
        %v415 = vld [vmem:[%s414] sm:$0xff]
        %v416 = vld [vmem:[%s414 + $0x8] sm:$0xff]
        %v417 = vld [vmem:[%s414 + $0x10] sm:$0xff]
        %v418 = vld [vmem:[%s414 + $0x18] sm:$0xff]
        %v419 = vld [vmem:[%s414 + $0x20] sm:$0xff]
        %v420 = vld [vmem:[%s414 + $0x28] sm:$0xff]
        %v421 = vld [vmem:[%s414 + $0x30] sm:$0xff]
        %v422 = vld [vmem:[%s414 + $0x38] sm:$0xff]
        %v423 = vld [vmem:[%s414 + $0x40] sm:$0xff]
        %v424 = vld [vmem:[%s414 + $0x48] sm:$0xff]
        %v425 = vld [vmem:[%s414 + $0x50] sm:$0xff]
        %v426 = vld [vmem:[%s414 + $0x58] sm:$0xff]
        %vm427 = vcmp.gt.f32.partialorder %v415, %v402
        %vm428 = vcmp.gt.f32.partialorder %v416, %v403
        %vm429 = vcmp.gt.f32.partialorder %v417, %v404
        %vm430 = vcmp.gt.f32.partialorder %v418, %v405
        %vm431 = vcmp.gt.f32.partialorder %v419, %v406
        %vm432 = vcmp.gt.f32.partialorder %v420, %v407
        %vm433 = vcmp.gt.f32.partialorder %v421, %v408
        %vm434 = vcmp.gt.f32.partialorder %v422, %v409
        %vm435 = vcmp.gt.f32.partialorder %v423, %v410
        %vm436 = vcmp.gt.f32.partialorder %v424, %v411
        %vm437 = vcmp.gt.f32.partialorder %v425, %v412
        %vm438 = vcmp.gt.f32.partialorder %v426, %v413
        %v439 = vsel %vm427, 0.15, 0.05
        %v440 = vsel %vm428, 0.15, 0.05
        %v441 = vsel %vm429, 0.15, 0.05
        %v442 = vsel %vm430, 0.15, 0.05
        %v443 = vsel %vm431, 0.15, 0.05
        %v444 = vsel %vm432, 0.15, 0.05
        %v445 = vsel %vm433, 0.15, 0.05
        %v446 = vsel %vm434, 0.15, 0.05
        %v447 = vsel %vm435, 0.15, 0.05
        %v448 = vsel %vm436, 0.15, 0.05
        %v449 = vsel %vm437, 0.15, 0.05
        %v450 = vsel %vm438, 0.15, 0.05
        %v451 = vmax.f32 %v402, %v415
        %v452 = vmax.f32 %v403, %v416
        %v453 = vmax.f32 %v404, %v417
        %v454 = vmax.f32 %v405, %v418
        %v455 = vmax.f32 %v406, %v419
        %v456 = vmax.f32 %v407, %v420
        %v457 = vmax.f32 %v408, %v421
        %v458 = vmax.f32 %v409, %v422
        %v459 = vmax.f32 %v410, %v423
        %v460 = vmax.f32 %v411, %v424
        %v461 = vmax.f32 %v412, %v425
        %v462 = vmax.f32 %v413, %v426
        %s463 = scalar_lea.vmem %s377, 288 [#allocation2]
        %v464 = vld [vmem:[%s463] sm:$0xff]
        %v465 = vld [vmem:[%s463 + $0x8] sm:$0xff]
        %v466 = vld [vmem:[%s463 + $0x10] sm:$0xff]
        %v467 = vld [vmem:[%s463 + $0x18] sm:$0xff]
        %v468 = vld [vmem:[%s463 + $0x20] sm:$0xff]
        %v469 = vld [vmem:[%s463 + $0x28] sm:$0xff]
        %v470 = vld [vmem:[%s463 + $0x30] sm:$0xff]
        %v471 = vld [vmem:[%s463 + $0x38] sm:$0xff]
        %v472 = vld [vmem:[%s463 + $0x40] sm:$0xff]
        %v473 = vld [vmem:[%s463 + $0x48] sm:$0xff]
        %v474 = vld [vmem:[%s463 + $0x50] sm:$0xff]
        %v475 = vld [vmem:[%s463 + $0x58] sm:$0xff]
        %vm476 = vcmp.gt.f32.partialorder %v464, %v451
        %vm477 = vcmp.gt.f32.partialorder %v465, %v452
        %vm478 = vcmp.gt.f32.partialorder %v466, %v453
        %vm479 = vcmp.gt.f32.partialorder %v467, %v454
        %vm480 = vcmp.gt.f32.partialorder %v468, %v455
        %vm481 = vcmp.gt.f32.partialorder %v469, %v456
        %vm482 = vcmp.gt.f32.partialorder %v470, %v457
        %vm483 = vcmp.gt.f32.partialorder %v471, %v458
        %vm484 = vcmp.gt.f32.partialorder %v472, %v459
        %vm485 = vcmp.gt.f32.partialorder %v473, %v460
        %vm486 = vcmp.gt.f32.partialorder %v474, %v461
        %vm487 = vcmp.gt.f32.partialorder %v475, %v462
        %v488 = vsel %vm476, 0.25, %v439
        %v489 = vsel %vm477, 0.25, %v440
        %v490 = vsel %vm478, 0.25, %v441
        %v491 = vsel %vm479, 0.25, %v442
        %v492 = vsel %vm480, 0.25, %v443
        %v493 = vsel %vm481, 0.25, %v444
        %v494 = vsel %vm482, 0.25, %v445
        %v495 = vsel %vm483, 0.25, %v446
        %v496 = vsel %vm484, 0.25, %v447
        %v497 = vsel %vm485, 0.25, %v448
        %v498 = vsel %vm486, 0.25, %v449
        %v499 = vsel %vm487, 0.25, %v450
        %v500 = vmax.f32 %v451, %v464
        %v501 = vmax.f32 %v452, %v465
        %v502 = vmax.f32 %v453, %v466
        %v503 = vmax.f32 %v454, %v467
        %v504 = vmax.f32 %v455, %v468
        %v505 = vmax.f32 %v456, %v469
        %v506 = vmax.f32 %v457, %v470
        %v507 = vmax.f32 %v458, %v471
        %v508 = vmax.f32 %v459, %v472
        %v509 = vmax.f32 %v460, %v473
        %v510 = vmax.f32 %v461, %v474
        %v511 = vmax.f32 %v462, %v475
        %s512 = scalar_lea.vmem %s377, 384 [#allocation2]
        %v513 = vld [vmem:[%s512] sm:$0xff]
        %v514 = vld [vmem:[%s512 + $0x8] sm:$0xff]
        %v515 = vld [vmem:[%s512 + $0x10] sm:$0xff]
        %v516 = vld [vmem:[%s512 + $0x18] sm:$0xff]
        %v517 = vld [vmem:[%s512 + $0x20] sm:$0xff]
        %v518 = vld [vmem:[%s512 + $0x28] sm:$0xff]
        %v519 = vld [vmem:[%s512 + $0x30] sm:$0xff]
        %v520 = vld [vmem:[%s512 + $0x38] sm:$0xff]
        %v521 = vld [vmem:[%s512 + $0x40] sm:$0xff]
        %v522 = vld [vmem:[%s512 + $0x48] sm:$0xff]
        %v523 = vld [vmem:[%s512 + $0x50] sm:$0xff]
        %v524 = vld [vmem:[%s512 + $0x58] sm:$0xff]
        %vm525 = vcmp.gt.f32.partialorder %v513, %v500
        %vm526 = vcmp.gt.f32.partialorder %v514, %v501
        %vm527 = vcmp.gt.f32.partialorder %v515, %v502
        %vm528 = vcmp.gt.f32.partialorder %v516, %v503
        %vm529 = vcmp.gt.f32.partialorder %v517, %v504
        %vm530 = vcmp.gt.f32.partialorder %v518, %v505
        %vm531 = vcmp.gt.f32.partialorder %v519, %v506
        %vm532 = vcmp.gt.f32.partialorder %v520, %v507
        %vm533 = vcmp.gt.f32.partialorder %v521, %v508
        %vm534 = vcmp.gt.f32.partialorder %v522, %v509
        %vm535 = vcmp.gt.f32.partialorder %v523, %v510
        %vm536 = vcmp.gt.f32.partialorder %v524, %v511
        %v537 = vsel %vm525, 0.35, %v488
        %v538 = vsel %vm526, 0.35, %v489
        %v539 = vsel %vm527, 0.35, %v490
        %v540 = vsel %vm528, 0.35, %v491
        %v541 = vsel %vm529, 0.35, %v492
        %v542 = vsel %vm530, 0.35, %v493
        %v543 = vsel %vm531, 0.35, %v494
        %v544 = vsel %vm532, 0.35, %v495
        %v545 = vsel %vm533, 0.35, %v496
        %v546 = vsel %vm534, 0.35, %v497
        %v547 = vsel %vm535, 0.35, %v498
        %v548 = vsel %vm536, 0.35, %v499
        %v549 = vmax.f32 %v500, %v513
        %v550 = vmax.f32 %v501, %v514
        %v551 = vmax.f32 %v502, %v515
        %v552 = vmax.f32 %v503, %v516
        %v553 = vmax.f32 %v504, %v517
        %v554 = vmax.f32 %v505, %v518
        %v555 = vmax.f32 %v506, %v519
        %v556 = vmax.f32 %v507, %v520
        %v557 = vmax.f32 %v508, %v521
        %v558 = vmax.f32 %v509, %v522
        %v559 = vmax.f32 %v510, %v523
        %v560 = vmax.f32 %v511, %v524
        %s561 = scalar_lea.vmem %s377, 480 [#allocation2]
        %v562 = vld [vmem:[%s561] sm:$0xff]
        %v563 = vld [vmem:[%s561 + $0x8] sm:$0xff]
        %v564 = vld [vmem:[%s561 + $0x10] sm:$0xff]
        %v565 = vld [vmem:[%s561 + $0x18] sm:$0xff]
        %v566 = vld [vmem:[%s561 + $0x20] sm:$0xff]
        %v567 = vld [vmem:[%s561 + $0x28] sm:$0xff]
        %v568 = vld [vmem:[%s561 + $0x30] sm:$0xff]
        %v569 = vld [vmem:[%s561 + $0x38] sm:$0xff]
        %v570 = vld [vmem:[%s561 + $0x40] sm:$0xff]
        %v571 = vld [vmem:[%s561 + $0x48] sm:$0xff]
        %v572 = vld [vmem:[%s561 + $0x50] sm:$0xff]
        %v573 = vld [vmem:[%s561 + $0x58] sm:$0xff]
        %vm574 = vcmp.gt.f32.partialorder %v562, %v549
        %vm575 = vcmp.gt.f32.partialorder %v563, %v550
        %vm576 = vcmp.gt.f32.partialorder %v564, %v551
        %vm577 = vcmp.gt.f32.partialorder %v565, %v552
        %vm578 = vcmp.gt.f32.partialorder %v566, %v553
        %vm579 = vcmp.gt.f32.partialorder %v567, %v554
        %vm580 = vcmp.gt.f32.partialorder %v568, %v555
        %vm581 = vcmp.gt.f32.partialorder %v569, %v556
        %vm582 = vcmp.gt.f32.partialorder %v570, %v557
        %vm583 = vcmp.gt.f32.partialorder %v571, %v558
        %vm584 = vcmp.gt.f32.partialorder %v572, %v559
        %vm585 = vcmp.gt.f32.partialorder %v573, %v560
        %v586 = vsel %vm574, 0.45, %v537
        %v587 = vsel %vm575, 0.45, %v538
        %v588 = vsel %vm576, 0.45, %v539
        %v589 = vsel %vm577, 0.45, %v540
        %v590 = vsel %vm578, 0.45, %v541
        %v591 = vsel %vm579, 0.45, %v542
        %v592 = vsel %vm580, 0.45, %v543
        %v593 = vsel %vm581, 0.45, %v544
        %v594 = vsel %vm582, 0.45, %v545
        %v595 = vsel %vm583, 0.45, %v546
        %v596 = vsel %vm584, 0.45, %v547
        %v597 = vsel %vm585, 0.45, %v548
        %v598 = vmax.f32 %v549, %v562
        %v599 = vmax.f32 %v550, %v563
        %v600 = vmax.f32 %v551, %v564
        %v601 = vmax.f32 %v552, %v565
        %v602 = vmax.f32 %v553, %v566
        %v603 = vmax.f32 %v554, %v567
        %v604 = vmax.f32 %v555, %v568
        %v605 = vmax.f32 %v556, %v569
        %v606 = vmax.f32 %v557, %v570
        %v607 = vmax.f32 %v558, %v571
        %v608 = vmax.f32 %v559, %v572
        %v609 = vmax.f32 %v560, %v573
        %s610 = scalar_lea.vmem %s377, 576 [#allocation2]
        %v611 = vld [vmem:[%s610] sm:$0xff]
        %v612 = vld [vmem:[%s610 + $0x8] sm:$0xff]
        %v613 = vld [vmem:[%s610 + $0x10] sm:$0xff]
        %v614 = vld [vmem:[%s610 + $0x18] sm:$0xff]
        %v615 = vld [vmem:[%s610 + $0x20] sm:$0xff]
        %v616 = vld [vmem:[%s610 + $0x28] sm:$0xff]
        %v617 = vld [vmem:[%s610 + $0x30] sm:$0xff]
        %v618 = vld [vmem:[%s610 + $0x38] sm:$0xff]
        %v619 = vld [vmem:[%s610 + $0x40] sm:$0xff]
        %v620 = vld [vmem:[%s610 + $0x48] sm:$0xff]
        %v621 = vld [vmem:[%s610 + $0x50] sm:$0xff]
        %v622 = vld [vmem:[%s610 + $0x58] sm:$0xff]
        %vm623 = vcmp.gt.f32.partialorder %v611, %v598
        %vm624 = vcmp.gt.f32.partialorder %v612, %v599
        %vm625 = vcmp.gt.f32.partialorder %v613, %v600
        %vm626 = vcmp.gt.f32.partialorder %v614, %v601
        %vm627 = vcmp.gt.f32.partialorder %v615, %v602
        %vm628 = vcmp.gt.f32.partialorder %v616, %v603
        %vm629 = vcmp.gt.f32.partialorder %v617, %v604
        %vm630 = vcmp.gt.f32.partialorder %v618, %v605
        %vm631 = vcmp.gt.f32.partialorder %v619, %v606
        %vm632 = vcmp.gt.f32.partialorder %v620, %v607
        %vm633 = vcmp.gt.f32.partialorder %v621, %v608
        %vm634 = vcmp.gt.f32.partialorder %v622, %v609
        %v635 = vsel %vm623, 0.55, %v586
        %v636 = vsel %vm624, 0.55, %v587
        %v637 = vsel %vm625, 0.55, %v588
        %v638 = vsel %vm626, 0.55, %v589
        %v639 = vsel %vm627, 0.55, %v590
        %v640 = vsel %vm628, 0.55, %v591
        %v641 = vsel %vm629, 0.55, %v592
        %v642 = vsel %vm630, 0.55, %v593
        %v643 = vsel %vm631, 0.55, %v594
        %v644 = vsel %vm632, 0.55, %v595
        %v645 = vsel %vm633, 0.55, %v596
        %v646 = vsel %vm634, 0.55, %v597
        %v647 = vmax.f32 %v598, %v611
        %v648 = vmax.f32 %v599, %v612
        %v649 = vmax.f32 %v600, %v613
        %v650 = vmax.f32 %v601, %v614
        %v651 = vmax.f32 %v602, %v615
        %v652 = vmax.f32 %v603, %v616
        %v653 = vmax.f32 %v604, %v617
        %v654 = vmax.f32 %v605, %v618
        %v655 = vmax.f32 %v606, %v619
        %v656 = vmax.f32 %v607, %v620
        %v657 = vmax.f32 %v608, %v621
        %v658 = vmax.f32 %v609, %v622
        %s659 = scalar_lea.vmem %s377, 672 [#allocation2]
        %v660 = vld [vmem:[%s659] sm:$0xff]
        %v661 = vld [vmem:[%s659 + $0x8] sm:$0xff]
        %v662 = vld [vmem:[%s659 + $0x10] sm:$0xff]
        %v663 = vld [vmem:[%s659 + $0x18] sm:$0xff]
        %v664 = vld [vmem:[%s659 + $0x20] sm:$0xff]
        %v665 = vld [vmem:[%s659 + $0x28] sm:$0xff]
        %v666 = vld [vmem:[%s659 + $0x30] sm:$0xff]
        %v667 = vld [vmem:[%s659 + $0x38] sm:$0xff]
        %v668 = vld [vmem:[%s659 + $0x40] sm:$0xff]
        %v669 = vld [vmem:[%s659 + $0x48] sm:$0xff]
        %v670 = vld [vmem:[%s659 + $0x50] sm:$0xff]
        %v671 = vld [vmem:[%s659 + $0x58] sm:$0xff]
        %vm672 = vcmp.gt.f32.partialorder %v660, %v647
        %vm673 = vcmp.gt.f32.partialorder %v661, %v648
        %vm674 = vcmp.gt.f32.partialorder %v662, %v649
        %vm675 = vcmp.gt.f32.partialorder %v663, %v650
        %vm676 = vcmp.gt.f32.partialorder %v664, %v651
        %vm677 = vcmp.gt.f32.partialorder %v665, %v652
        %vm678 = vcmp.gt.f32.partialorder %v666, %v653
        %vm679 = vcmp.gt.f32.partialorder %v667, %v654
        %vm680 = vcmp.gt.f32.partialorder %v668, %v655
        %vm681 = vcmp.gt.f32.partialorder %v669, %v656
        %vm682 = vcmp.gt.f32.partialorder %v670, %v657
        %vm683 = vcmp.gt.f32.partialorder %v671, %v658
        %v684 = vsel %vm672, 0.65, %v635
        %v685 = vsel %vm673, 0.65, %v636
        %v686 = vsel %vm674, 0.65, %v637
        %v687 = vsel %vm675, 0.65, %v638
        %v688 = vsel %vm676, 0.65, %v639
        %v689 = vsel %vm677, 0.65, %v640
        %v690 = vsel %vm678, 0.65, %v641
        %v691 = vsel %vm679, 0.65, %v642
        %v692 = vsel %vm680, 0.65, %v643
        %v693 = vsel %vm681, 0.65, %v644
        %v694 = vsel %vm682, 0.65, %v645
        %v695 = vsel %vm683, 0.65, %v646
        %v696 = vmax.f32 %v647, %v660
        %v697 = vmax.f32 %v648, %v661
        %v698 = vmax.f32 %v649, %v662
        %v699 = vmax.f32 %v650, %v663
        %v700 = vmax.f32 %v651, %v664
        %v701 = vmax.f32 %v652, %v665
        %v702 = vmax.f32 %v653, %v666
        %v703 = vmax.f32 %v654, %v667
        %v704 = vmax.f32 %v655, %v668
        %v705 = vmax.f32 %v656, %v669
        %v706 = vmax.f32 %v657, %v670
        %v707 = vmax.f32 %v658, %v671
        %s708 = scalar_lea.vmem %s377, 768 [#allocation2]
        %v709 = vld [vmem:[%s708] sm:$0xff]
        %v710 = vld [vmem:[%s708 + $0x8] sm:$0xff]
        %v711 = vld [vmem:[%s708 + $0x10] sm:$0xff]
        %v712 = vld [vmem:[%s708 + $0x18] sm:$0xff]
        %v713 = vld [vmem:[%s708 + $0x20] sm:$0xff]
        %v714 = vld [vmem:[%s708 + $0x28] sm:$0xff]
        %v715 = vld [vmem:[%s708 + $0x30] sm:$0xff]
        %v716 = vld [vmem:[%s708 + $0x38] sm:$0xff]
        %v717 = vld [vmem:[%s708 + $0x40] sm:$0xff]
        %v718 = vld [vmem:[%s708 + $0x48] sm:$0xff]
        %v719 = vld [vmem:[%s708 + $0x50] sm:$0xff]
        %v720 = vld [vmem:[%s708 + $0x58] sm:$0xff]
        %vm721 = vcmp.gt.f32.partialorder %v709, %v696
        %vm722 = vcmp.gt.f32.partialorder %v710, %v697
        %vm723 = vcmp.gt.f32.partialorder %v711, %v698
        %vm724 = vcmp.gt.f32.partialorder %v712, %v699
        %vm725 = vcmp.gt.f32.partialorder %v713, %v700
        %vm726 = vcmp.gt.f32.partialorder %v714, %v701
        %vm727 = vcmp.gt.f32.partialorder %v715, %v702
        %vm728 = vcmp.gt.f32.partialorder %v716, %v703
        %vm729 = vcmp.gt.f32.partialorder %v717, %v704
        %vm730 = vcmp.gt.f32.partialorder %v718, %v705
        %vm731 = vcmp.gt.f32.partialorder %v719, %v706
        %vm732 = vcmp.gt.f32.partialorder %v720, %v707
        %v733 = vsel %vm721, 0.75, %v684
        %v734 = vsel %vm722, 0.75, %v685
        %v735 = vsel %vm723, 0.75, %v686
        %v736 = vsel %vm724, 0.75, %v687
        %v737 = vsel %vm725, 0.75, %v688
        %v738 = vsel %vm726, 0.75, %v689
        %v739 = vsel %vm727, 0.75, %v690
        %v740 = vsel %vm728, 0.75, %v691
        %v741 = vsel %vm729, 0.75, %v692
        %v742 = vsel %vm730, 0.75, %v693
        %v743 = vsel %vm731, 0.75, %v694
        %v744 = vsel %vm732, 0.75, %v695
        %v745 = vmax.f32 %v696, %v709
        %v746 = vmax.f32 %v697, %v710
        %v747 = vmax.f32 %v698, %v711
        %v748 = vmax.f32 %v699, %v712
        %v749 = vmax.f32 %v700, %v713
        %v750 = vmax.f32 %v701, %v714
        %v751 = vmax.f32 %v702, %v715
        %v752 = vmax.f32 %v703, %v716
        %v753 = vmax.f32 %v704, %v717
        %v754 = vmax.f32 %v705, %v718
        %v755 = vmax.f32 %v706, %v719
        %v756 = vmax.f32 %v707, %v720
        %s757 = scalar_lea.vmem %s377, 864 [#allocation2]
        %v758 = vld [vmem:[%s757] sm:$0xff]
        %v759 = vld [vmem:[%s757 + $0x8] sm:$0xff]
        %v760 = vld [vmem:[%s757 + $0x10] sm:$0xff]
        %v761 = vld [vmem:[%s757 + $0x18] sm:$0xff]
        %v762 = vld [vmem:[%s757 + $0x20] sm:$0xff]
        %v763 = vld [vmem:[%s757 + $0x28] sm:$0xff]
        %v764 = vld [vmem:[%s757 + $0x30] sm:$0xff]
        %v765 = vld [vmem:[%s757 + $0x38] sm:$0xff]
        %v766 = vld [vmem:[%s757 + $0x40] sm:$0xff]
        %v767 = vld [vmem:[%s757 + $0x48] sm:$0xff]
        %v768 = vld [vmem:[%s757 + $0x50] sm:$0xff]
        %v769 = vld [vmem:[%s757 + $0x58] sm:$0xff]
        %vm770 = vcmp.gt.f32.partialorder %v758, %v745
        %vm771 = vcmp.gt.f32.partialorder %v759, %v746
        %vm772 = vcmp.gt.f32.partialorder %v760, %v747
        %vm773 = vcmp.gt.f32.partialorder %v761, %v748
        %vm774 = vcmp.gt.f32.partialorder %v762, %v749
        %vm775 = vcmp.gt.f32.partialorder %v763, %v750
        %vm776 = vcmp.gt.f32.partialorder %v764, %v751
        %vm777 = vcmp.gt.f32.partialorder %v765, %v752
        %vm778 = vcmp.gt.f32.partialorder %v766, %v753
        %vm779 = vcmp.gt.f32.partialorder %v767, %v754
        %vm780 = vcmp.gt.f32.partialorder %v768, %v755
        %vm781 = vcmp.gt.f32.partialorder %v769, %v756
        %v782 = vsel %vm770, 0.85, %v733
        %v783 = vsel %vm771, 0.85, %v734
        %v784 = vsel %vm772, 0.85, %v735
        %v785 = vsel %vm773, 0.85, %v736
        %v786 = vsel %vm774, 0.85, %v737
        %v787 = vsel %vm775, 0.85, %v738
        %v788 = vsel %vm776, 0.85, %v739
        %v789 = vsel %vm777, 0.85, %v740
        %v790 = vsel %vm778, 0.85, %v741
        %v791 = vsel %vm779, 0.85, %v742
        %v792 = vsel %vm780, 0.85, %v743
        %v793 = vsel %vm781, 0.85, %v744
        %v794 = vmax.f32 %v745, %v758
        %v795 = vmax.f32 %v746, %v759
        %v796 = vmax.f32 %v747, %v760
        %v797 = vmax.f32 %v748, %v761
        %v798 = vmax.f32 %v749, %v762
        %v799 = vmax.f32 %v750, %v763
        %v800 = vmax.f32 %v751, %v764
        %v801 = vmax.f32 %v752, %v765
        %v802 = vmax.f32 %v753, %v766
        %v803 = vmax.f32 %v754, %v767
        %v804 = vmax.f32 %v755, %v768
        %v805 = vmax.f32 %v756, %v769
        %s806 = scalar_lea.vmem %s377, 960 [#allocation2]
        %v807 = vld [vmem:[%s806] sm:$0xff]
        %v808 = vld [vmem:[%s806 + $0x8] sm:$0xff]
        %v809 = vld [vmem:[%s806 + $0x10] sm:$0xff]
        %v810 = vld [vmem:[%s806 + $0x18] sm:$0xff]
        %v811 = vld [vmem:[%s806 + $0x20] sm:$0xff]
        %v812 = vld [vmem:[%s806 + $0x28] sm:$0xff]
        %v813 = vld [vmem:[%s806 + $0x30] sm:$0xff]
        %v814 = vld [vmem:[%s806 + $0x38] sm:$0xff]
        %v815 = vld [vmem:[%s806 + $0x40] sm:$0xff]
        %v816 = vld [vmem:[%s806 + $0x48] sm:$0xff]
        %v817 = vld [vmem:[%s806 + $0x50] sm:$0xff]
        %v818 = vld [vmem:[%s806 + $0x58] sm:$0xff]
        %vm819 = vcmp.gt.f32.partialorder %v807, %v794
        %vm820 = vcmp.gt.f32.partialorder %v808, %v795
        %vm821 = vcmp.gt.f32.partialorder %v809, %v796
        %vm822 = vcmp.gt.f32.partialorder %v810, %v797
        %vm823 = vcmp.gt.f32.partialorder %v811, %v798
        %vm824 = vcmp.gt.f32.partialorder %v812, %v799
        %vm825 = vcmp.gt.f32.partialorder %v813, %v800
        %vm826 = vcmp.gt.f32.partialorder %v814, %v801
        %vm827 = vcmp.gt.f32.partialorder %v815, %v802
        %vm828 = vcmp.gt.f32.partialorder %v816, %v803
        %vm829 = vcmp.gt.f32.partialorder %v817, %v804
        %vm830 = vcmp.gt.f32.partialorder %v818, %v805
        %v831 = vsel %vm819, 0.95, %v782
        %v832 = vsel %vm820, 0.95, %v783
        %v833 = vsel %vm821, 0.95, %v784
        %v834 = vsel %vm822, 0.95, %v785
        %v835 = vsel %vm823, 0.95, %v786
        %v836 = vsel %vm824, 0.95, %v787
        %v837 = vsel %vm825, 0.95, %v788
        %v838 = vsel %vm826, 0.95, %v789
        %v839 = vsel %vm827, 0.95, %v790
        %v840 = vsel %vm828, 0.95, %v791
        %v841 = vsel %vm829, 0.95, %v792
        %v842 = vsel %vm830, 0.95, %v793
        %v843 = vld [vmem:[%s377] sm:$0xff]
        %v844 = vld [vmem:[%s377 + $0x8] sm:$0xff]
        %v845 = vld [vmem:[%s377 + $0x10] sm:$0xff]
        %v846 = vld [vmem:[%s377 + $0x18] sm:$0xff]
        %v847 = vld [vmem:[%s377 + $0x20] sm:$0xff]
        %v848 = vld [vmem:[%s377 + $0x28] sm:$0xff]
        %v849 = vld [vmem:[%s377 + $0x30] sm:$0xff]
        %v850 = vld [vmem:[%s377 + $0x38] sm:$0xff]
        %v851 = vld [vmem:[%s377 + $0x40] sm:$0xff]
        %v852 = vld [vmem:[%s377 + $0x48] sm:$0xff]
        %v853 = vld [vmem:[%s377 + $0x50] sm:$0xff]
        %v854 = vld [vmem:[%s377 + $0x58] sm:$0xff]
        %v855 = vmul.f32 %v843, 2.0
        %v856 = vmul.f32 %v844, 2.0
        %v857 = vmul.f32 %v845, 2.0
        %v858 = vmul.f32 %v846, 2.0
        %v859 = vmul.f32 %v847, 2.0
        %v860 = vmul.f32 %v848, 2.0
        %v861 = vmul.f32 %v849, 2.0
        %v862 = vmul.f32 %v850, 2.0
        %v863 = vmul.f32 %v851, 2.0
        %v864 = vmul.f32 %v852, 2.0
        %v865 = vmul.f32 %v853, 2.0
        %v866 = vmul.f32 %v854, 2.0
        %v867 = vsub.f32 %v855, 1.0
        %v868 = vsub.f32 %v856, 1.0
        %v869 = vsub.f32 %v857, 1.0
        %v870 = vsub.f32 %v858, 1.0
        %v871 = vsub.f32 %v859, 1.0
        %v872 = vsub.f32 %v860, 1.0
        %v873 = vsub.f32 %v861, 1.0
        %v874 = vsub.f32 %v862, 1.0
        %v875 = vsub.f32 %v863, 1.0
        %v876 = vsub.f32 %v864, 1.0
        %v877 = vsub.f32 %v865, 1.0
        %v878 = vsub.f32 %v866, 1.0
        %v879 = vmul.f32 %v867, 0.1
        %v880 = vmul.f32 %v868, 0.1
        %v881 = vmul.f32 %v869, 0.1
        %v882 = vmul.f32 %v870, 0.1
        %v883 = vmul.f32 %v871, 0.1
        %v884 = vmul.f32 %v872, 0.1
        %v885 = vmul.f32 %v873, 0.1
        %v886 = vmul.f32 %v874, 0.1
        %v887 = vmul.f32 %v875, 0.1
        %v888 = vmul.f32 %v876, 0.1
        %v889 = vmul.f32 %v877, 0.1
        %v890 = vmul.f32 %v878, 0.1
        %v891 = vadd.f32 %v879, %v831
        %v892 = vadd.f32 %v880, %v832
        %v893 = vadd.f32 %v881, %v833
        %v894 = vadd.f32 %v882, %v834
        %v895 = vadd.f32 %v883, %v835
        %v896 = vadd.f32 %v884, %v836
        %v897 = vadd.f32 %v885, %v837
        %v898 = vadd.f32 %v886, %v838
        %v899 = vadd.f32 %v887, %v839
        %v900 = vadd.f32 %v888, %v840
        %v901 = vadd.f32 %v889, %v841
        %v902 = vadd.f32 %v890, %v842
        %v903 = vmax.f32 %v891, 0.0
        %v904 = vmax.f32 %v892, 0.0
        %v905 = vmax.f32 %v893, 0.0
        %v906 = vmax.f32 %v894, 0.0
        %v907 = vmax.f32 %v895, 0.0
        %v908 = vmax.f32 %v896, 0.0
        %v909 = vmax.f32 %v897, 0.0
        %v910 = vmax.f32 %v898, 0.0
        %v911 = vmax.f32 %v899, 0.0
        %v912 = vmax.f32 %v900, 0.0
        %v913 = vmax.f32 %v901, 0.0
        %v914 = vmax.f32 %v902, 0.0
        %v915 = vmin.f32 %v903, 1.0
        %v916 = vmin.f32 %v904, 1.0
        %v917 = vmin.f32 %v905, 1.0
        %v918 = vmin.f32 %v906, 1.0
        %v919 = vmin.f32 %v907, 1.0
        %v920 = vmin.f32 %v908, 1.0
        %v921 = vmin.f32 %v909, 1.0
        %v922 = vmin.f32 %v910, 1.0
        %v923 = vmin.f32 %v911, 1.0
        %v924 = vmin.f32 %v912, 1.0
        %v925 = vmin.f32 %v913, 1.0
        %v926 = vmin.f32 %v914, 1.0
        %927 = vst [vmem:[%s399] sm:$0xff] %v915
        %928 = vst [vmem:[%s399 + $0x8] sm:$0xff] %v916
        %929 = vst [vmem:[%s399 + $0x10] sm:$0xff] %v917
        %930 = vst [vmem:[%s399 + $0x18] sm:$0xff] %v918
        %931 = vst [vmem:[%s399 + $0x20] sm:$0xff] %v919
        %932 = vst [vmem:[%s399 + $0x28] sm:$0xff] %v920
        %933 = vst [vmem:[%s399 + $0x30] sm:$0xff] %v921
        %934 = vst [vmem:[%s399 + $0x38] sm:$0xff] %v922
        %935 = vst [vmem:[%s399 + $0x40] sm:$0xff] %v923
        %936 = vst [vmem:[%s399 + $0x48] sm:$0xff] %v924
        %937 = vst [vmem:[%s399 + $0x50] sm:$0xff] %v925
        %938 = vst [vmem:[%s399 + $0x58] sm:$0xff] %v926
        %s939 = smul.u32 12, %s12
        %p940 = scmp.lt.s32.totalorder %s939, 23
        %s941 = scalar_select %p940, %s939, 23
        %s942 = smul.addr %s941, 8
        %s943 = scalar_lea.vmem %s1, %s942
        // Predicated region
        $region48: #{_forward_impl.1} parent=42 // pred_check
          %p944 = pneg %p56
        $region49: #{_forward_impl.1} parent=42 // pred_check_branch
          %946 = sbr.rel (%p944) target = $region51
        $region50: #{_forward_impl.1} parent=42 // pred_region
          %s947 = smul.u32 12, %s12
        $region51: #{_forward_impl.1} parent=42 // pred_fallthru
          _
      $region43: #{_forward_impl.1} parent=5 // pred_fallthru
        _
      %p948 = scmp.le.s32.totalorder 2, %s7
      // Predicated region
      $region52: #{_forward_impl.1} parent=5 // pred_check
        %p949 = pneg %p948
      $region53: #{_forward_impl.1} parent=5 // pred_check_branch
        %951 = sbr.rel (%p949) target = $region55
      $region54: #{_forward_impl.1} parent=5 // pred_region
        %s952 = ssub.s32 %s7, 2
        // Predicated region
        $region56: #{_forward_impl.1} parent=54 // pred_check
          %p953 = pneg %p62
        $region57: #{_forward_impl.1} parent=54 // pred_check_branch
          %955 = sbr.rel (%p953) target = $region59
        $region58: #{_forward_impl.1} parent=54 // pred_region
          %s956 = smul.u32 12, %s13
          %p957 = scmp.lt.s32.totalorder %s956, 23
          %s958 = scalar_select %p957, %s956, 23
          %s959 = smul.addr %s958, 8
          %s960 = scalar_lea.vmem %s1, %s959
        $region59: #{_forward_impl.1} parent=54 // pred_fallthru
          _
      $region55: #{_forward_impl.1} parent=5 // pred_fallthru
        _
    $region6: #{_forward_impl.1} parent=1 // loop_footer
      %s11 = sadd.s32 1, %s7
    $region7: #{_forward_impl.1} parent=1 // loop_footer_branch
      %6 = sbr.rel target = $region3
    $region8: #{_forward_impl.1} parent=1 // loop_exit
      _

</llo_original>
